<compile_context>
chip_gen: v7x
topology: tpu7x:2x2x1
jax: 0.10.0
libtpu: 0.0.40
codegen_flags: <defaults>
</compile_context>

<pallas_src>
import functools

import jax
import jax.numpy as jnp
from jax.experimental import pallas as pl
from jax.experimental.pallas import tpu as pltpu


def _round_up(x, m):
    return (x + m - 1) // m * m


# ----------------------------------------------------------------------------
# Pallas kernel: fused (embedding gather -> split-first-Linear -> ReLU ...) -> out(1)
# Batch-on-lanes layout: activations are (features, TILE_B).
# ----------------------------------------------------------------------------
def _mlp_kernel(*refs, n_hidden, compute_dtype):
    # refs layout:
    #   users_ref (1, TILE_B) i32, items_ref (1, TILE_B) i32,
    #   emb_u_T (E, VU), emb_v_T (E, VI),
    #   w1u_T (D1, E), w1v_T (D1, E), b1 (D1, 1),
    #   (w_i_T (D_i, D_{i-1}), b_i (D_i, 1)) for i = 2..n_hidden,
    #   w_out (D_last, 1) f32, b_out (1,) f32 in SMEM,
    #   o_ref (1, TILE_B) f32
    users_ref, items_ref = refs[0], refs[1]
    o_ref = refs[-1]
    p = refs[2:-1]

    tile_b = users_ref.shape[1]

    def gather_t(table_t, idx_row):
        # In-kernel embedding lookup as a one-hot MXU matmul:
        #   table_T (E, V) @ onehot (V, TILE_B) -> (E, TILE_B), batch on lanes.
        vocab = table_t.shape[1]
        vocab_ids = jax.lax.broadcasted_iota(jnp.int32, (vocab, tile_b), 0)
        onehot = jnp.where(vocab_ids == idx_row, 1.0, 0.0).astype(compute_dtype)
        return jnp.dot(table_t, onehot, preferred_element_type=jnp.float32)

    u_t = gather_t(p[0][...], users_ref[...])      # (E, TILE_B) f32
    v_t = gather_t(p[1][...], items_ref[...])      # (E, TILE_B) f32

    # Layer 1: W1^T @ concat(u, v) == W1u^T @ u + W1v^T @ v  (concat fused away)
    h = (jnp.dot(p[2][...], u_t.astype(compute_dtype),
                 preferred_element_type=jnp.float32)
         + jnp.dot(p[3][...], v_t.astype(compute_dtype),
                   preferred_element_type=jnp.float32)
         + p[4][...])                              # bias (D1, 1) broadcasts over lanes
    h = jnp.maximum(h, 0.0)
    # TODO(synk): nn.Dropout is identity in eval/inference mode; training-time
    #             dropout masking is intentionally not implemented here.

    idx = 5
    for _ in range(1, n_hidden):
        w_t = p[idx][...]
        b = p[idx + 1][...]
        idx += 2
        h = jnp.dot(w_t, h.astype(compute_dtype),
                    preferred_element_type=jnp.float32) + b
        h = jnp.maximum(h, 0.0)

    # Final N=1 projection as lane-wise multiply + sublane reduction -> (1, TILE_B)
    w_out = p[idx][...]                            # (D_last, 1) f32
    b_out = p[idx + 1][0]                          # f32 scalar from SMEM
    o_ref[...] = jnp.sum(h * w_out, axis=0, keepdims=True) + b_out


def mlp_forward(users, items, emb_user, emb_item, weights, biases,
                *, tile_b=2048, compute_dtype=jnp.bfloat16):
    """Fused NeuralCF MLP tower: in-kernel embedding gather + dense layers.

    users, items : (B,) integer indices.
    emb_user     : (n_user, emb_dim) f32 ;  emb_item : (n_item, emb_dim) f32.
    weights      : list of (d_in, d_out) f32, last entry has d_out == 1.
    biases       : list of (d_out,) f32.
    Returns (B, 1) f32 predictions.
    """
    B = users.shape[0]
    n_user, emb_dim = emb_user.shape
    n_item, emb_dim_i = emb_item.shape
    assert emb_dim == emb_dim_i
    assert weights[0].shape[0] == 2 * emb_dim
    n_hidden = len(weights) - 1
    assert n_hidden >= 1
    assert tile_b % 128 == 0, "tile_b must be a multiple of 128 (lane-dense tiles)"

    # Effective batch tile: cap so there are >= 2 grid tiles when possible
    # (populates both v7x TensorCores with the "parallel" batch axis) while still
    # amortizing the ~0.35 us per-grid-step overhead for large batches.
    half_b = max(128, _round_up(pl.cdiv(B, 2), 128))
    tile_b_eff = max(128, min(tile_b, half_b))
    num_tiles = pl.cdiv(B, tile_b_eff)
    b_pad = num_tiles * tile_b_eff

    users_p = jnp.pad(users.astype(jnp.int32), (0, b_pad - B)).reshape(1, b_pad)
    items_p = jnp.pad(items.astype(jnp.int32), (0, b_pad - B)).reshape(1, b_pad)

    # VMEM-resident transposed tables, vocab padded to a lane multiple so the
    # one-hot contraction dimension is aligned. Padded columns are never selected
    # (all indices < vocab), padded batch rows gather row 0 and are sliced off.
    vu = _round_up(n_user, 128)
    vi = _round_up(n_item, 128)
    emb_u_t = jnp.pad(emb_user.T, ((0, 0), (0, vu - n_user))).astype(compute_dtype)
    emb_v_t = jnp.pad(emb_item.T, ((0, 0), (0, vi - n_item))).astype(compute_dtype)

    # Guard the VMEM-resident gather path (tables + per-tile one-hot must fit).
    itemsize = jnp.dtype(compute_dtype).itemsize
    if (vu + vi) * tile_b_eff * itemsize + int(emb_u_t.nbytes) + int(emb_v_t.nbytes) \
            > 24 * 1024 * 1024:
        # TODO(synk): for large vocabularies switch to a manual DMA row-gather
        #             (pl.ANY tables + pltpu.make_async_copy per batch tile).
        raise NotImplementedError(
            "Embedding tables too large for the VMEM-resident one-hot gather path.")

    w1 = weights[0]
    params = [
        emb_u_t, emb_v_t,
        w1[:emb_dim].T.astype(compute_dtype),               # (d1, emb): rows hit by u
        w1[emb_dim:].T.astype(compute_dtype),               # (d1, emb): rows hit by v
        biases[0].reshape(-1, 1).astype(jnp.float32),
    ]
    for w, b in zip(weights[1:-1], biases[1:-1]):
        params.append(w.T.astype(compute_dtype))            # (d_out, d_in)
        params.append(b.reshape(-1, 1).astype(jnp.float32))
    params.append(weights[-1].reshape(-1, 1).astype(jnp.float32))  # (d_last, 1) column
    params.append(biases[-1].reshape(-1).astype(jnp.float32))      # (1,) SMEM scalar

    # Indices: tiled over the batch.  Tables/weights/biases: constant index_map so
    # they stay VMEM-resident across grid steps (no re-DMA).
    idx_spec = pl.BlockSpec((1, tile_b_eff), lambda i: (0, i))
    in_specs = ([idx_spec, idx_spec]
                + [pl.BlockSpec(p.shape, lambda i: (0, 0)) for p in params[:-1]]
                + [pl.BlockSpec(memory_space=pltpu.MemorySpace.SMEM)])
    out_spec = pl.BlockSpec((1, tile_b_eff), lambda i: (0, i))
    out_shape = jax.ShapeDtypeStruct((1, b_pad), jnp.float32)

    flops = 2 * b_pad * ((vu + vi) * emb_dim
                         + sum(int(w.shape[0]) * int(w.shape[1]) for w in weights))
    bytes_accessed = (int(users_p.nbytes) + int(items_p.nbytes) + b_pad * 4
                      + sum(int(p.nbytes) for p in params))
    cost = pl.CostEstimate(flops=flops, transcendentals=0,
                           bytes_accessed=bytes_accessed)

    kernel = functools.partial(_mlp_kernel, n_hidden=n_hidden,
                               compute_dtype=compute_dtype)

    out = pl.pallas_call(
        kernel,
        grid=(num_tiles,),
        in_specs=in_specs,
        out_specs=out_spec,
        out_shape=out_shape,
        compiler_params=pltpu.CompilerParams(
            dimension_semantics=("parallel",)),   # megacore-shard the batch axis
        cost_estimate=cost,
    )(users_p, items_p, *params)

    return out[0, :B].reshape(B, 1)


# ----------------------------------------------------------------------------
# Parameter setup (deterministic, mirrors MLP.__init__ shapes) + pure-JAX reference
# ----------------------------------------------------------------------------
def init_params(key, n_user, n_item, layers):
    emb_dim = layers[0] // 2
    keys = jax.random.split(key, 2 + 2 * len(layers))

    # nn.init.normal_ on embeddings -> N(0, 1)
    emb_user = jax.random.normal(keys[0], (n_user, emb_dim), dtype=jnp.float32)
    emb_item = jax.random.normal(keys[1], (n_item, emb_dim), dtype=jnp.float32)

    weights, biases = [], []
    k_idx = 2
    dims = list(zip(layers[:-1], layers[1:])) + [(layers[-1], 1)]
    for (din, dout) in dims:
        bound = 1.0 / jnp.sqrt(jnp.float32(din))
        w = jax.random.uniform(keys[k_idx], (din, dout), jnp.float32, -bound, bound)
        b = jax.random.uniform(keys[k_idx + 1], (dout,), jnp.float32, -bound, bound)
        weights.append(w)
        biases.append(b)
        k_idx += 2

    return emb_user, emb_item, weights, biases


def reference_forward(users, items, emb_user, emb_item, weights, biases):
    u = jnp.take(emb_user, users, axis=0)
    v = jnp.take(emb_item, items, axis=0)
    h = jnp.concatenate([u, v], axis=1)
    for w, b in zip(weights[:-1], biases[:-1]):
        h = jnp.maximum(h @ w + b, 0.0)
    return h @ weights[-1] + biases[-1]


# ----------------------------------------------------------------------------
if __name__ == "__main__":
    # Small, MLP-consistent config (layers[0] must be even; emb_dim = 16)
    n_user, n_item = 100, 200
    layers = [32, 16, 8]
    dropouts = [0.0, 0.0]         # unused at inference (eval mode)
    batch = 300                   # exercises the multi-tile grid + tail padding

    key = jax.random.PRNGKey(0)
    pkey, ukey, ikey = jax.random.split(key, 3)
    emb_user, emb_item, weights, biases = init_params(pkey, n_user, n_item, layers)

    users = jax.random.randint(ukey, (batch,), 0, n_user, dtype=jnp.int32)
    items = jax.random.randint(ikey, (batch,), 0, n_item, dtype=jnp.int32)

    ref = reference_forward(users, items, emb_user, emb_item, weights, biases)

    # f32 path: exact check of the fused in-kernel-gather tower.
    preds_f32 = mlp_forward(users, items, emb_user, emb_item, weights, biases,
                            compute_dtype=jnp.float32)
    preds_f32 = jax.block_until_ready(preds_f32)
    assert preds_f32.shape == (batch, 1), preds_f32.shape
    assert jnp.allclose(preds_f32, ref, atol=1e-4, rtol=1e-4), \
        float(jnp.max(jnp.abs(preds_f32 - ref)))

    # Default bf16 path (bandwidth-optimized; f32 accumulation/bias/ReLU): loose check.
    preds = mlp_forward(users, items, emb_user, emb_item, weights, biases)
    preds = jax.block_until_ready(preds)
    assert preds.shape == (batch, 1), preds.shape
    assert float(jnp.max(jnp.abs(preds - ref))) < 0.25

    print("KERNEL_OK")
</pallas_src>

<mosaic_0001>
module attributes {stable_mosaic.version = 11 : i64} {
  func.func @_mlp_kernel(%arg0: i32, %arg1: memref<1x256xi32, #tpu.memory_space<vmem>>, %arg2: memref<1x256xi32, #tpu.memory_space<vmem>>, %arg3: memref<16x128xf32, #tpu.memory_space<vmem>>, %arg4: memref<16x256xf32, #tpu.memory_space<vmem>>, %arg5: memref<16x16xf32, #tpu.memory_space<vmem>>, %arg6: memref<16x16xf32, #tpu.memory_space<vmem>>, %arg7: memref<16x1xf32, #tpu.memory_space<vmem>>, %arg8: memref<8x16xf32, #tpu.memory_space<vmem>>, %arg9: memref<8x1xf32, #tpu.memory_space<vmem>>, %arg10: memref<8x1xf32, #tpu.memory_space<vmem>>, %arg11: memref<1xf32, #tpu.memory_space<smem>>, %arg12: memref<1x256xf32, #tpu.memory_space<vmem>>) attributes {dimension_semantics = [#tpu.dimension_semantics<parallel>], iteration_bounds = array<i64: 2>, scalar_prefetch = 0 : i64, scratch_operands = 0 : i64, tpu.core_type = #tpu.core_type<tc>, window_params = [{transform_indices = @transform_0, window_bounds = array<i64: 1, 256>}, {transform_indices = @transform_1, window_bounds = array<i64: 1, 256>}, {pipeline_mode = #tpu.pipeline_mode<synchronous>, transform_indices = @transform_2, window_bounds = array<i64: 16, 128>}, {pipeline_mode = #tpu.pipeline_mode<synchronous>, transform_indices = @transform_3, window_bounds = array<i64: 16, 256>}, {pipeline_mode = #tpu.pipeline_mode<synchronous>, transform_indices = @transform_4, window_bounds = array<i64: 16, 16>}, {pipeline_mode = #tpu.pipeline_mode<synchronous>, transform_indices = @transform_5, window_bounds = array<i64: 16, 16>}, {pipeline_mode = #tpu.pipeline_mode<synchronous>, transform_indices = @transform_6, window_bounds = array<i64: 16, 1>}, {pipeline_mode = #tpu.pipeline_mode<synchronous>, transform_indices = @transform_7, window_bounds = array<i64: 8, 16>}, {pipeline_mode = #tpu.pipeline_mode<synchronous>, transform_indices = @transform_8, window_bounds = array<i64: 8, 1>}, {pipeline_mode = #tpu.pipeline_mode<synchronous>, transform_indices = @transform_9, window_bounds = array<i64: 8, 1>}, {transform_indices = @transform_10, window_bounds = array<i64: 1>}, {transform_indices = @transform_11, window_bounds = array<i64: 1, 256>}]} {
    %c0 = arith.constant 0 : index
    %c0_0 = arith.constant 0 : index
    %0 = vector.load %arg3[%c0, %c0_0] : memref<16x128xf32, #tpu.memory_space<vmem>>, vector<16x128xf32>
    %c0_1 = arith.constant 0 : index
    %c0_2 = arith.constant 0 : index
    %1 = vector.load %arg1[%c0_1, %c0_2] : memref<1x256xi32, #tpu.memory_space<vmem>>, vector<1x256xi32>
    %2 = tpu.iota {dimensions = array<i32: 0>} : vector<128x256xi32>
    %3 = vector.broadcast %1 : vector<1x256xi32> to vector<128x256xi32>
    %4 = arith.cmpi eq, %2, %3 : vector<128x256xi32>
    %cst = arith.constant 1.000000e+00 : f32
    %cst_3 = arith.constant 0.000000e+00 : f32
    %5 = vector.broadcast %cst : f32 to vector<128x256xf32>
    %6 = vector.broadcast %cst_3 : f32 to vector<128x256xf32>
    %7 = arith.select %4, %5, %6 : vector<128x256xi1>, vector<128x256xf32>
    %cst_4 = arith.constant dense<0.000000e+00> : vector<16x256xf32>
    %8 = tpu.matmul %0, %7, %cst_4 {dimension_numbers = #tpu.dot_dimension_numbers<[1], [0], [0], [1], [0, 0, 1, 1], [], []>} : vector<16x128xf32>, vector<128x256xf32>, vector<16x256xf32> -> vector<16x256xf32>
    %c0_5 = arith.constant 0 : index
    %c0_6 = arith.constant 0 : index
    %9 = vector.load %arg4[%c0_5, %c0_6] : memref<16x256xf32, #tpu.memory_space<vmem>>, vector<16x256xf32>
    %c0_7 = arith.constant 0 : index
    %c0_8 = arith.constant 0 : index
    %10 = vector.load %arg2[%c0_7, %c0_8] : memref<1x256xi32, #tpu.memory_space<vmem>>, vector<1x256xi32>
    %11 = tpu.iota {dimensions = array<i32: 0>} : vector<256x256xi32>
    %12 = vector.broadcast %10 : vector<1x256xi32> to vector<256x256xi32>
    %13 = arith.cmpi eq, %11, %12 : vector<256x256xi32>
    %cst_9 = arith.constant 1.000000e+00 : f32
    %cst_10 = arith.constant 0.000000e+00 : f32
    %14 = vector.broadcast %cst_9 : f32 to vector<256x256xf32>
    %15 = vector.broadcast %cst_10 : f32 to vector<256x256xf32>
    %16 = arith.select %13, %14, %15 : vector<256x256xi1>, vector<256x256xf32>
    %cst_11 = arith.constant dense<0.000000e+00> : vector<16x256xf32>
    %17 = tpu.matmul %9, %16, %cst_11 {dimension_numbers = #tpu.dot_dimension_numbers<[1], [0], [0], [1], [0, 0, 1, 1], [], []>} : vector<16x256xf32>, vector<256x256xf32>, vector<16x256xf32> -> vector<16x256xf32>
    %c0_12 = arith.constant 0 : index
    %c0_13 = arith.constant 0 : index
    %18 = vector.load %arg5[%c0_12, %c0_13] : memref<16x16xf32, #tpu.memory_space<vmem>>, vector<16x16xf32>
    %cst_14 = arith.constant dense<0.000000e+00> : vector<16x256xf32>
    %19 = tpu.matmul %18, %8, %cst_14 {dimension_numbers = #tpu.dot_dimension_numbers<[1], [0], [0], [1], [0, 0, 1, 1], [], []>} : vector<16x16xf32>, vector<16x256xf32>, vector<16x256xf32> -> vector<16x256xf32>
    %c0_15 = arith.constant 0 : index
    %c0_16 = arith.constant 0 : index
    %20 = vector.load %arg6[%c0_15, %c0_16] : memref<16x16xf32, #tpu.memory_space<vmem>>, vector<16x16xf32>
    %cst_17 = arith.constant dense<0.000000e+00> : vector<16x256xf32>
    %21 = tpu.matmul %20, %17, %cst_17 {dimension_numbers = #tpu.dot_dimension_numbers<[1], [0], [0], [1], [0, 0, 1, 1], [], []>} : vector<16x16xf32>, vector<16x256xf32>, vector<16x256xf32> -> vector<16x256xf32>
    %22 = arith.addf %19, %21 : vector<16x256xf32>
    %c0_18 = arith.constant 0 : index
    %c0_19 = arith.constant 0 : index
    %23 = vector.load %arg7[%c0_18, %c0_19] : memref<16x1xf32, #tpu.memory_space<vmem>>, vector<16x1xf32>
    %24 = vector.broadcast %23 : vector<16x1xf32> to vector<16x256xf32>
    %25 = arith.addf %22, %24 : vector<16x256xf32>
    %cst_20 = arith.constant 0.000000e+00 : f32
    %26 = vector.broadcast %cst_20 : f32 to vector<16x256xf32>
    %27 = arith.maximumf %25, %26 : vector<16x256xf32>
    %c0_21 = arith.constant 0 : index
    %c0_22 = arith.constant 0 : index
    %28 = vector.load %arg8[%c0_21, %c0_22] : memref<8x16xf32, #tpu.memory_space<vmem>>, vector<8x16xf32>
    %c0_23 = arith.constant 0 : index
    %c0_24 = arith.constant 0 : index
    %29 = vector.load %arg9[%c0_23, %c0_24] : memref<8x1xf32, #tpu.memory_space<vmem>>, vector<8x1xf32>
    %cst_25 = arith.constant dense<0.000000e+00> : vector<8x256xf32>
    %30 = tpu.matmul %28, %27, %cst_25 {dimension_numbers = #tpu.dot_dimension_numbers<[1], [0], [0], [1], [0, 0, 1, 1], [], []>} : vector<8x16xf32>, vector<16x256xf32>, vector<8x256xf32> -> vector<8x256xf32>
    %31 = vector.broadcast %29 : vector<8x1xf32> to vector<8x256xf32>
    %32 = arith.addf %30, %31 : vector<8x256xf32>
    %cst_26 = arith.constant 0.000000e+00 : f32
    %33 = vector.broadcast %cst_26 : f32 to vector<8x256xf32>
    %34 = arith.maximumf %32, %33 : vector<8x256xf32>
    %c0_27 = arith.constant 0 : index
    %c0_28 = arith.constant 0 : index
    %35 = vector.load %arg10[%c0_27, %c0_28] : memref<8x1xf32, #tpu.memory_space<vmem>>, vector<8x1xf32>
    %c0_29 = arith.constant 0 : index
    %36 = memref.load %arg11[%c0_29] : memref<1xf32, #tpu.memory_space<smem>>
    %37 = vector.broadcast %35 : vector<8x1xf32> to vector<8x256xf32>
    %38 = arith.mulf %34, %37 : vector<8x256xf32>
    %cst_30 = arith.constant dense<0.000000e+00> : vector<256xf32>
    %39 = vector.multi_reduction <add>, %38, %cst_30 [0] : vector<8x256xf32> to vector<256xf32>
    %40 = vector.shape_cast %39 : vector<256xf32> to vector<1x256xf32>
    %41 = vector.broadcast %36 : f32 to vector<1x256xf32>
    %42 = arith.addf %40, %41 : vector<1x256xf32>
    %c0_31 = arith.constant 0 : index
    %c0_32 = arith.constant 0 : index
    %43 = vector.load %arg12[%c0_31, %c0_32] : memref<1x256xf32, #tpu.memory_space<vmem>>, vector<1x256xf32>
    tpu.vector_store %arg12[%c0_31, %c0_32], %42 {strides = array<i32>} : memref<1x256xf32, #tpu.memory_space<vmem>>, vector<1x256xf32>,
    return
  }
  func.func @transform_0(%arg0: i32) -> (i32, i32) {
    %c0_i32 = arith.constant 0 : i32
    %c0_i32_0 = arith.constant 0 : i32
    return %c0_i32, %arg0 : i32, i32
  }
  func.func @transform_1(%arg0: i32) -> (i32, i32) {
    %c0_i32 = arith.constant 0 : i32
    %c0_i32_0 = arith.constant 0 : i32
    return %c0_i32, %arg0 : i32, i32
  }
  func.func @transform_2(%arg0: i32) -> (i32, i32) {
    %c0_i32 = arith.constant 0 : i32
    %c0_i32_0 = arith.constant 0 : i32
    %c0_i32_1 = arith.constant 0 : i32
    return %c0_i32, %c0_i32_0 : i32, i32
  }
  func.func @transform_3(%arg0: i32) -> (i32, i32) {
    %c0_i32 = arith.constant 0 : i32
    %c0_i32_0 = arith.constant 0 : i32
    %c0_i32_1 = arith.constant 0 : i32
    return %c0_i32, %c0_i32_0 : i32, i32
  }
  func.func @transform_4(%arg0: i32) -> (i32, i32) {
    %c0_i32 = arith.constant 0 : i32
    %c0_i32_0 = arith.constant 0 : i32
    %c0_i32_1 = arith.constant 0 : i32
    return %c0_i32, %c0_i32_0 : i32, i32
  }
  func.func @transform_5(%arg0: i32) -> (i32, i32) {
    %c0_i32 = arith.constant 0 : i32
    %c0_i32_0 = arith.constant 0 : i32
    %c0_i32_1 = arith.constant 0 : i32
    return %c0_i32, %c0_i32_0 : i32, i32
  }
  func.func @transform_6(%arg0: i32) -> (i32, i32) {
    %c0_i32 = arith.constant 0 : i32
    %c0_i32_0 = arith.constant 0 : i32
    %c0_i32_1 = arith.constant 0 : i32
    return %c0_i32, %c0_i32_0 : i32, i32
  }
  func.func @transform_7(%arg0: i32) -> (i32, i32) {
    %c0_i32 = arith.constant 0 : i32
    %c0_i32_0 = arith.constant 0 : i32
    %c0_i32_1 = arith.constant 0 : i32
    return %c0_i32, %c0_i32_0 : i32, i32
  }
  func.func @transform_8(%arg0: i32) -> (i32, i32) {
    %c0_i32 = arith.constant 0 : i32
    %c0_i32_0 = arith.constant 0 : i32
    %c0_i32_1 = arith.constant 0 : i32
    return %c0_i32, %c0_i32_0 : i32, i32
  }
  func.func @transform_9(%arg0: i32) -> (i32, i32) {
    %c0_i32 = arith.constant 0 : i32
    %c0_i32_0 = arith.constant 0 : i32
    %c0_i32_1 = arith.constant 0 : i32
    return %c0_i32, %c0_i32_0 : i32, i32
  }
  func.func @transform_10(%arg0: i32) -> i32 {
    %c0_i32 = arith.constant 0 : i32
    %c0_i32_0 = arith.constant 0 : i32
    return %c0_i32 : i32
  }
  func.func @transform_11(%arg0: i32) -> (i32, i32) {
    %c0_i32 = arith.constant 0 : i32
    %c0_i32_0 = arith.constant 0 : i32
    return %c0_i32, %arg0 : i32, i32
  }
}

</mosaic_0001>

<llo_original>
// kernel: tpu_custom_call.1
$region0: #{tpu_custom_call.1}
  #allocation0 [shape = 'u32[]', space=smem, size = 0x4, offset = 0x4, fixed_abs, tag = 'smem constant byte address 0x4 - core index']
  #allocation1 [shape = 'u32[144,128]{1,0:T(1,128)}', space=vmem, size = 0x12000, scoped, tag = 'internal scratch']
  #allocation2 [shape = 'f32[1]{0:T(128)S(6)}', space=smem, size = 0x200, scoped, tag = 'scoped memory for tpu_custom_call.1']
  %s0 = inlined_call_operand.hbm [shape: s32[1,512], index: 0, kind: input, shape index: {}]
  %s1 = inlined_call_operand.hbm [shape: s32[1,512], index: 1, kind: input, shape index: {}]
  %s2 = inlined_call_operand.vmem [shape: f32[16,128], index: 2, kind: input, shape index: {}]
  %s3 = inlined_call_operand.vmem [shape: f32[16,256], index: 3, kind: input, shape index: {}]
  %s4 = inlined_call_operand.hbm [shape: f32[16,16], index: 4, kind: input, shape index: {}]
  %s5 = inlined_call_operand.hbm [shape: f32[16,16], index: 5, kind: input, shape index: {}]
  %s6 = inlined_call_operand.vmem [shape: f32[16,1], index: 6, kind: input, shape index: {}]
  %s7 = inlined_call_operand.vmem [shape: f32[8,16], index: 7, kind: input, shape index: {}]
  %s8 = inlined_call_operand.vmem [shape: f32[8,1], index: 8, kind: input, shape index: {}]
  %s9 = inlined_call_operand.vmem [shape: f32[8,1], index: 9, kind: input, shape index: {}]
  %s10 = inlined_call_operand.<no memory space> [shape: f32[1], index: 10, kind: input, shape index: {}]
  %s11 = inlined_call_operand.hbm [shape: f32[1,512], index: 11, kind: output, shape index: {}]
  %s12 = sld [smem:[#allocation0]]
  $region93: #{tpu_custom_call.1} parent=0
    _
  %s14 = ssub.s32 1, %s12
  %s15 = scalar_select 0, %s14, %s12
  %16 = sst [smem:[#allocation2]] %s10
  $region1: #{tpu_custom_call.1} parent=0
    #allocation3 [shape = 'u8[2048]{0}', space=vmem, size = 0x800, scoped, tag = 'input window, operand 0']
    #allocation4 [shape = 's32[2]{0}', space=sflag, size = 0x8, scoped, tag = 'scoped memory for tpu_custom_call.1']
    #allocation5 [shape = 's32[2]{0}', space=sflag, size = 0x8, scoped, tag = 'scoped memory for tpu_custom_call.1']
    #allocation6 [shape = 'u8[2048]{0}', space=vmem, size = 0x800, scoped, tag = 'input window, operand 1']
    #allocation7 [shape = 's32[2]{0}', space=sflag, size = 0x8, scoped, tag = 'scoped memory for tpu_custom_call.1']
    #allocation8 [shape = 'u8[8192]{0}', space=vmem, size = 0x2000, scoped, tag = 'input window, operand 4, single buffered']
    #allocation9 [shape = 'u8[8192]{0}', space=vmem, size = 0x2000, scoped, tag = 'input window, operand 5, single buffered']
    #allocation10 [shape = 's32[1]{0}', space=sflag, size = 0x4, scoped, tag = 'scoped memory for tpu_custom_call.1']
    #allocation11 [shape = 'u8[2048]{0}', space=vmem, size = 0x800, scoped, tag = 'output window, operand 0']
    %17 = vsyncpa [#allocation4], 0
    %s18 = scalar_lea.sflag [#allocation4], 1
    %19 = vsyncpa %s18, 0
    %20 = vsyncpa [#allocation7], 0
    %s21 = scalar_lea.sflag [#allocation7], 1
    %22 = vsyncpa %s21, 0
    %23 = vsyncpa [#allocation10], 0
    %24 = vsyncpa [#allocation5], 0
    %s25 = scalar_lea.sflag [#allocation5], 1
    %26 = vsyncpa %s25, 0
    loop: start=0, step=1, limit=4
    $region2: #{tpu_custom_call.1} parent=1 // loop_pre_header
      _
    $region3: #{tpu_custom_call.1} parent=1 // loop_header
      %s28 = sphi 0, %s32
      %p29 = scmp.ge.s32.totalorder %s28, 4
      %s38 = sphi 0, %s40
      %s41 = sphi 0, %s38
      %s42 = sphi 0, %s41
      %s58 = sphi 0, %s42
      %s64 = sphi 0, %s66
      %s67 = sphi 0, %s64
      %s68 = sphi 0, %s67
      %s84 = sphi 0, %s68
      %s88 = sphi 0, %s88
      %s90 = sphi 0, %s88
      %s91 = sphi 0, %s90
      %s105 = sphi 0, %s91
      %s109 = sphi 0, %s109
      %s111 = sphi 0, %s109
      %s112 = sphi 0, %s111
      %s126 = sphi 0, %s112
      %s130 = sphi 0, %s130
      %s132 = sphi 0, %s130
      %s133 = sphi 0, %s132
      %s147 = sphi 0, %s133
      %s151 = sphi 0, %s151
      %s153 = sphi 0, %s151
      %s154 = sphi 0, %s153
      %s168 = sphi 0, %s154
      %s172 = sphi 0, %s172
      %s174 = sphi 0, %s172
      %s175 = sphi 0, %s174
      %s189 = sphi 0, %s175
      %s193 = sphi 0, %s193
      %s195 = sphi 0, %s193
      %s196 = sphi 0, %s195
      %s210 = sphi 0, %s196
      %s214 = sphi 0, %s214
      %s216 = sphi 0, %s214
      %s217 = sphi 0, %s216
      %s231 = sphi 0, %s217
      %s235 = sphi 0, %s235
      %s237 = sphi 0, %s235
      %s238 = sphi 0, %s237
      %s252 = sphi 0, %s238
      %s256 = sphi 0, %s256
      %s258 = sphi 0, %s256
      %s259 = sphi 0, %s258
      %s273 = sphi 0, %s259
      %s279 = sphi 0, %s281
      %s282 = sphi 0, %s279
      %s283 = sphi 0, %s282
      %s299 = sphi 0, %s283
    $region4: #{tpu_custom_call.1} parent=1 // loop_header_branch
      %31 = sbr.rel (%p29) target = $region8
    $region5: #{tpu_custom_call.1} parent=1 // loop_body
      %s33 = ssub.s32 %s28, 1
      %s34 = ssub.s32 %s28, 2
      %s35 = sadd.s32 %s28, 1
      %s36 = ssub.s32 %s28, %s35
      %p37 = scmp.eq.s32.totalorder %s36, 0
      %s39 = sadd.s32 %s38, 1
      %s40 = scalar_select %p37, %s38, %s39
      %p43 = pneg %p37
      %p44 = scmp.eq.s32.totalorder %s28, 1
      %p45 = por %p43, %p44
      %p46 = scmp.ne.s32.totalorder %s38, %s41
      %p47 = scmp.eq.s32.totalorder %s28, 0
      %p48 = por %p46, %p47
      %p49 = scmp.ne.s32.totalorder %s38, %s41
      %p50 = scmp.eq.s32.totalorder %s33, 1
      %p51 = por %p49, %p50
      %p52 = scmp.ne.s32.totalorder %s41, %s42
      %p53 = scmp.eq.s32.totalorder %s33, 0
      %p54 = por %p52, %p53
      %p55 = scmp.ne.s32.totalorder %s41, %s42
      %p56 = scmp.eq.s32.totalorder %s34, 1
      %p57 = por %p55, %p56
      %p59 = scmp.ne.s32.totalorder %s42, %s58
      %p60 = scmp.eq.s32.totalorder %s34, 0
      %p61 = por %p59, %p60
      %s62 = ssub.s32 %s28, %s35
      %p63 = scmp.eq.s32.totalorder %s62, 0
      %s65 = sadd.s32 %s64, 1
      %s66 = scalar_select %p63, %s64, %s65
      %p69 = pneg %p63
      %p70 = scmp.eq.s32.totalorder %s28, 1
      %p71 = por %p69, %p70
      %p72 = scmp.ne.s32.totalorder %s64, %s67
      %p73 = scmp.eq.s32.totalorder %s28, 0
      %p74 = por %p72, %p73
      %p75 = scmp.ne.s32.totalorder %s64, %s67
      %p76 = scmp.eq.s32.totalorder %s33, 1
      %p77 = por %p75, %p76
      %p78 = scmp.ne.s32.totalorder %s67, %s68
      %p79 = scmp.eq.s32.totalorder %s33, 0
      %p80 = por %p78, %p79
      %p81 = scmp.ne.s32.totalorder %s67, %s68
      %p82 = scmp.eq.s32.totalorder %s34, 1
      %p83 = por %p81, %p82
      %p85 = scmp.ne.s32.totalorder %s68, %s84
      %p86 = scmp.eq.s32.totalorder %s34, 0
      %p87 = por %p85, %p86
      %s89 = sadd.s32 %s88, 1
      %p92 = scmp.eq.s32.totalorder %s28, 1
      %p93 = scmp.ne.s32.totalorder %s88, %s90
      %p94 = scmp.eq.s32.totalorder %s28, 0
      %p95 = por %p93, %p94
      %p96 = scmp.ne.s32.totalorder %s88, %s90
      %p97 = scmp.eq.s32.totalorder %s33, 1
      %p98 = por %p96, %p97
      %p99 = scmp.ne.s32.totalorder %s90, %s91
      %p100 = scmp.eq.s32.totalorder %s33, 0
      %p101 = por %p99, %p100
      %p102 = scmp.ne.s32.totalorder %s90, %s91
      %p103 = scmp.eq.s32.totalorder %s34, 1
      %p104 = por %p102, %p103
      %p106 = scmp.ne.s32.totalorder %s91, %s105
      %p107 = scmp.eq.s32.totalorder %s34, 0
      %p108 = por %p106, %p107
      %s110 = sadd.s32 %s109, 1
      %p113 = scmp.eq.s32.totalorder %s28, 1
      %p114 = scmp.ne.s32.totalorder %s109, %s111
      %p115 = scmp.eq.s32.totalorder %s28, 0
      %p116 = por %p114, %p115
      %p117 = scmp.ne.s32.totalorder %s109, %s111
      %p118 = scmp.eq.s32.totalorder %s33, 1
      %p119 = por %p117, %p118
      %p120 = scmp.ne.s32.totalorder %s111, %s112
      %p121 = scmp.eq.s32.totalorder %s33, 0
      %p122 = por %p120, %p121
      %p123 = scmp.ne.s32.totalorder %s111, %s112
      %p124 = scmp.eq.s32.totalorder %s34, 1
      %p125 = por %p123, %p124
      %p127 = scmp.ne.s32.totalorder %s112, %s126
      %p128 = scmp.eq.s32.totalorder %s34, 0
      %p129 = por %p127, %p128
      %s131 = sadd.s32 %s130, 1
      %p134 = scmp.eq.s32.totalorder %s28, 1
      %p135 = scmp.ne.s32.totalorder %s130, %s132
      %p136 = scmp.eq.s32.totalorder %s28, 0
      %p137 = por %p135, %p136
      %p138 = scmp.ne.s32.totalorder %s130, %s132
      %p139 = scmp.eq.s32.totalorder %s33, 1
      %p140 = por %p138, %p139
      %p141 = scmp.ne.s32.totalorder %s132, %s133
      %p142 = scmp.eq.s32.totalorder %s33, 0
      %p143 = por %p141, %p142
      %p144 = scmp.ne.s32.totalorder %s132, %s133
      %p145 = scmp.eq.s32.totalorder %s34, 1
      %p146 = por %p144, %p145
      %p148 = scmp.ne.s32.totalorder %s133, %s147
      %p149 = scmp.eq.s32.totalorder %s34, 0
      %p150 = por %p148, %p149
      %s152 = sadd.s32 %s151, 1
      %p155 = scmp.eq.s32.totalorder %s28, 1
      %p156 = scmp.ne.s32.totalorder %s151, %s153
      %p157 = scmp.eq.s32.totalorder %s28, 0
      %p158 = por %p156, %p157
      %p159 = scmp.ne.s32.totalorder %s151, %s153
      %p160 = scmp.eq.s32.totalorder %s33, 1
      %p161 = por %p159, %p160
      %p162 = scmp.ne.s32.totalorder %s153, %s154
      %p163 = scmp.eq.s32.totalorder %s33, 0
      %p164 = por %p162, %p163
      %p165 = scmp.ne.s32.totalorder %s153, %s154
      %p166 = scmp.eq.s32.totalorder %s34, 1
      %p167 = por %p165, %p166
      %p169 = scmp.ne.s32.totalorder %s154, %s168
      %p170 = scmp.eq.s32.totalorder %s34, 0
      %p171 = por %p169, %p170
      %s173 = sadd.s32 %s172, 1
      %p176 = scmp.eq.s32.totalorder %s28, 1
      %p177 = scmp.ne.s32.totalorder %s172, %s174
      %p178 = scmp.eq.s32.totalorder %s28, 0
      %p179 = por %p177, %p178
      %p180 = scmp.ne.s32.totalorder %s172, %s174
      %p181 = scmp.eq.s32.totalorder %s33, 1
      %p182 = por %p180, %p181
      %p183 = scmp.ne.s32.totalorder %s174, %s175
      %p184 = scmp.eq.s32.totalorder %s33, 0
      %p185 = por %p183, %p184
      %p186 = scmp.ne.s32.totalorder %s174, %s175
      %p187 = scmp.eq.s32.totalorder %s34, 1
      %p188 = por %p186, %p187
      %p190 = scmp.ne.s32.totalorder %s175, %s189
      %p191 = scmp.eq.s32.totalorder %s34, 0
      %p192 = por %p190, %p191
      %s194 = sadd.s32 %s193, 1
      %p197 = scmp.eq.s32.totalorder %s28, 1
      %p198 = scmp.ne.s32.totalorder %s193, %s195
      %p199 = scmp.eq.s32.totalorder %s28, 0
      %p200 = por %p198, %p199
      %p201 = scmp.ne.s32.totalorder %s193, %s195
      %p202 = scmp.eq.s32.totalorder %s33, 1
      %p203 = por %p201, %p202
      %p204 = scmp.ne.s32.totalorder %s195, %s196
      %p205 = scmp.eq.s32.totalorder %s33, 0
      %p206 = por %p204, %p205
      %p207 = scmp.ne.s32.totalorder %s195, %s196
      %p208 = scmp.eq.s32.totalorder %s34, 1
      %p209 = por %p207, %p208
      %p211 = scmp.ne.s32.totalorder %s196, %s210
      %p212 = scmp.eq.s32.totalorder %s34, 0
      %p213 = por %p211, %p212
      %s215 = sadd.s32 %s214, 1
      %p218 = scmp.eq.s32.totalorder %s28, 1
      %p219 = scmp.ne.s32.totalorder %s214, %s216
      %p220 = scmp.eq.s32.totalorder %s28, 0
      %p221 = por %p219, %p220
      %p222 = scmp.ne.s32.totalorder %s214, %s216
      %p223 = scmp.eq.s32.totalorder %s33, 1
      %p224 = por %p222, %p223
      %p225 = scmp.ne.s32.totalorder %s216, %s217
      %p226 = scmp.eq.s32.totalorder %s33, 0
      %p227 = por %p225, %p226
      %p228 = scmp.ne.s32.totalorder %s216, %s217
      %p229 = scmp.eq.s32.totalorder %s34, 1
      %p230 = por %p228, %p229
      %p232 = scmp.ne.s32.totalorder %s217, %s231
      %p233 = scmp.eq.s32.totalorder %s34, 0
      %p234 = por %p232, %p233
      %s236 = sadd.s32 %s235, 1
      %p239 = scmp.eq.s32.totalorder %s28, 1
      %p240 = scmp.ne.s32.totalorder %s235, %s237
      %p241 = scmp.eq.s32.totalorder %s28, 0
      %p242 = por %p240, %p241
      %p243 = scmp.ne.s32.totalorder %s235, %s237
      %p244 = scmp.eq.s32.totalorder %s33, 1
      %p245 = por %p243, %p244
      %p246 = scmp.ne.s32.totalorder %s237, %s238
      %p247 = scmp.eq.s32.totalorder %s33, 0
      %p248 = por %p246, %p247
      %p249 = scmp.ne.s32.totalorder %s237, %s238
      %p250 = scmp.eq.s32.totalorder %s34, 1
      %p251 = por %p249, %p250
      %p253 = scmp.ne.s32.totalorder %s238, %s252
      %p254 = scmp.eq.s32.totalorder %s34, 0
      %p255 = por %p253, %p254
      %s257 = sadd.s32 %s256, 1
      %p260 = scmp.eq.s32.totalorder %s28, 1
      %p261 = scmp.ne.s32.totalorder %s256, %s258
      %p262 = scmp.eq.s32.totalorder %s28, 0
      %p263 = por %p261, %p262
      %p264 = scmp.ne.s32.totalorder %s256, %s258
      %p265 = scmp.eq.s32.totalorder %s33, 1
      %p266 = por %p264, %p265
      %p267 = scmp.ne.s32.totalorder %s258, %s259
      %p268 = scmp.eq.s32.totalorder %s33, 0
      %p269 = por %p267, %p268
      %p270 = scmp.ne.s32.totalorder %s258, %s259
      %p271 = scmp.eq.s32.totalorder %s34, 1
      %p272 = por %p270, %p271
      %p274 = scmp.ne.s32.totalorder %s259, %s273
      %p275 = scmp.eq.s32.totalorder %s34, 0
      %p276 = por %p274, %p275
      %s277 = ssub.s32 %s28, %s35
      %p278 = scmp.eq.s32.totalorder %s277, 0
      %s280 = sadd.s32 %s279, 1
      %s281 = scalar_select %p278, %s279, %s280
      %p284 = pneg %p278
      %p285 = scmp.eq.s32.totalorder %s28, 1
      %p286 = por %p284, %p285
      %p287 = scmp.ne.s32.totalorder %s279, %s282
      %p288 = scmp.eq.s32.totalorder %s28, 0
      %p289 = por %p287, %p288
      %p290 = scmp.ne.s32.totalorder %s279, %s282
      %p291 = scmp.eq.s32.totalorder %s33, 1
      %p292 = por %p290, %p291
      %p293 = scmp.ne.s32.totalorder %s282, %s283
      %p294 = scmp.eq.s32.totalorder %s33, 0
      %p295 = por %p293, %p294
      %p296 = scmp.ne.s32.totalorder %s282, %s283
      %p297 = scmp.eq.s32.totalorder %s34, 1
      %p298 = por %p296, %p297
      %p300 = scmp.ne.s32.totalorder %s283, %s299
      %p301 = scmp.eq.s32.totalorder %s34, 0
      %p302 = por %p300, %p301
      %p303 = scmp.le.s32.totalorder 1, %s28
      %p304 = scmp.lt.s32.totalorder %s28, 3
      %p305 = pnand %p303, %p304
      %p306 = pneg %p305
      // Predicated region
      $region9: #{tpu_custom_call.1} parent=5 // pred_check
        _
      $region10: #{tpu_custom_call.1} parent=5 // pred_check_branch
        %308 = sbr.rel (%p305) target = $region12
      $region11: #{tpu_custom_call.1} parent=5 // pred_region
        %s309 = ssub.s32 %s28, 1
        // Predicated region
        $region13: #{tpu_custom_call.1} parent=11 // pred_check
          %p310 = pneg %p101
        $region14: #{tpu_custom_call.1} parent=11 // pred_check_branch
          %312 = sbr.rel (%p310) target = $region16
        $region15: #{tpu_custom_call.1} parent=11 // pred_region
          _
        $region16: #{tpu_custom_call.1} parent=11 // pred_fallthru
          _
        // Predicated region
        $region17: #{tpu_custom_call.1} parent=11 // pred_check
          %p313 = pneg %p122
        $region18: #{tpu_custom_call.1} parent=11 // pred_check_branch
          %315 = sbr.rel (%p313) target = $region20
        $region19: #{tpu_custom_call.1} parent=11 // pred_region
          _
        $region20: #{tpu_custom_call.1} parent=11 // pred_fallthru
          _
        // Predicated region
        $region21: #{tpu_custom_call.1} parent=11 // pred_check
          %p316 = pneg %p143
        $region22: #{tpu_custom_call.1} parent=11 // pred_check_branch
          %318 = sbr.rel (%p316) target = $region24
        $region23: #{tpu_custom_call.1} parent=11 // pred_region
          %s320 = ssub.s32 256, 256
          %321 = vsyncadd [#allocation7], %s320
          %s322 = sshll.u32 [#allocation8], 4
          %s323 = int_to_ptr.vmem [resolvable:$true] %s322
          %328 = dma.hbm_to_vmem [thread:$0]  %s4, 256, %s323, [#allocation7], 128, 128, 8
        $region24: #{tpu_custom_call.1} parent=11 // pred_fallthru
          _
        // Predicated region
        $region25: #{tpu_custom_call.1} parent=11 // pred_check
          %p329 = pneg %p164
        $region26: #{tpu_custom_call.1} parent=11 // pred_check_branch
          %331 = sbr.rel (%p329) target = $region28
        $region27: #{tpu_custom_call.1} parent=11 // pred_region
          %s333 = ssub.s32 256, 256
          %334 = vsyncadd [#allocation10], %s333
          %s335 = sshll.u32 [#allocation9], 4
          %s336 = int_to_ptr.vmem [resolvable:$true] %s335
          %341 = dma.hbm_to_vmem [thread:$0]  %s5, 256, %s336, [#allocation10], 128, 128, 8
        $region28: #{tpu_custom_call.1} parent=11 // pred_fallthru
          _
        // Predicated region
        $region29: #{tpu_custom_call.1} parent=11 // pred_check
          %p342 = pneg %p185
        $region30: #{tpu_custom_call.1} parent=11 // pred_check_branch
          %344 = sbr.rel (%p342) target = $region32
        $region31: #{tpu_custom_call.1} parent=11 // pred_region
          _
        $region32: #{tpu_custom_call.1} parent=11 // pred_fallthru
          _
        // Predicated region
        $region33: #{tpu_custom_call.1} parent=11 // pred_check
          %p345 = pneg %p206
        $region34: #{tpu_custom_call.1} parent=11 // pred_check_branch
          %347 = sbr.rel (%p345) target = $region36
        $region35: #{tpu_custom_call.1} parent=11 // pred_region
          _
        $region36: #{tpu_custom_call.1} parent=11 // pred_fallthru
          _
        // Predicated region
        $region37: #{tpu_custom_call.1} parent=11 // pred_check
          %p348 = pneg %p227
        $region38: #{tpu_custom_call.1} parent=11 // pred_check_branch
          %350 = sbr.rel (%p348) target = $region40
        $region39: #{tpu_custom_call.1} parent=11 // pred_region
          _
        $region40: #{tpu_custom_call.1} parent=11 // pred_fallthru
          _
        // Predicated region
        $region41: #{tpu_custom_call.1} parent=11 // pred_check
          %p351 = pneg %p248
        $region42: #{tpu_custom_call.1} parent=11 // pred_check_branch
          %353 = sbr.rel (%p351) target = $region44
        $region43: #{tpu_custom_call.1} parent=11 // pred_region
          _
        $region44: #{tpu_custom_call.1} parent=11 // pred_fallthru
          _
        // Predicated region
        $region45: #{tpu_custom_call.1} parent=11 // pred_check
          %p354 = pneg %p269
        $region46: #{tpu_custom_call.1} parent=11 // pred_check_branch
          %356 = sbr.rel (%p354) target = $region48
        $region47: #{tpu_custom_call.1} parent=11 // pred_region
          _
        $region48: #{tpu_custom_call.1} parent=11 // pred_fallthru
          _
      $region12: #{tpu_custom_call.1} parent=5 // pred_fallthru
        _
      %p357 = scmp.lt.s32.totalorder %s28, 2
      // Predicated region
      $region49: #{tpu_custom_call.1} parent=5 // pred_check
        %p358 = pneg %p357
      $region50: #{tpu_custom_call.1} parent=5 // pred_check_branch
        %360 = sbr.rel (%p358) target = $region52
      $region51: #{tpu_custom_call.1} parent=5 // pred_region
        // Predicated region
        $region53: #{tpu_custom_call.1} parent=51 // pred_check
          %p361 = pneg %p48
        $region54: #{tpu_custom_call.1} parent=51 // pred_check_branch
          %363 = sbr.rel (%p361) target = $region56
        $region55: #{tpu_custom_call.1} parent=51 // pred_region
          %s364 = sand.u32 %s38, 1
          %s365 = scalar_lea.sflag [#allocation4], %s364
          %s366 = sand.u32 %s38, 1
          %s367 = smul.addr %s366, 2
          %s368 = scalar_lea.vmem [#allocation3], %s367
          %s369 = smul.u32 2, %s28
          %s371 = ssub.s32 32, 32
          %372 = vsyncadd %s365, %s371
          %s373 = smul.addr %s369, 16
          %s374 = scalar_lea.hbm %s0, %s373
          %s376 = sshll.u32 %s368, 4
          %s377 = int_to_ptr.vmem [resolvable:$true] %s376
          %379 = dma.hbm_to_vmem [thread:$0]  %s374, 32, %s377, %s365
        $region56: #{tpu_custom_call.1} parent=51 // pred_fallthru
          _
        // Predicated region
        $region57: #{tpu_custom_call.1} parent=51 // pred_check
          %p380 = pneg %p74
        $region58: #{tpu_custom_call.1} parent=51 // pred_check_branch
          %382 = sbr.rel (%p380) target = $region60
        $region59: #{tpu_custom_call.1} parent=51 // pred_region
          %s383 = sand.u32 %s28, 1
          %s384 = scalar_lea.sflag [#allocation7], %s383
          %s385 = sand.u32 %s64, 1
          %s386 = smul.addr %s385, 2
          %s387 = scalar_lea.vmem [#allocation6], %s386
          %s388 = smul.u32 2, %s28
          %s390 = ssub.s32 32, 32
          %391 = vsyncadd %s384, %s390
          %s392 = smul.addr %s388, 16
          %s393 = scalar_lea.hbm %s1, %s392
          %s395 = sshll.u32 %s387, 4
          %s396 = int_to_ptr.vmem [resolvable:$true] %s395
          %398 = dma.hbm_to_vmem [thread:$0]  %s393, 32, %s396, %s384
        $region60: #{tpu_custom_call.1} parent=51 // pred_fallthru
          _
      $region52: #{tpu_custom_call.1} parent=5 // pred_fallthru
        _
      %p399 = scmp.le.s32.totalorder 1, %s28
      %p400 = scmp.lt.s32.totalorder %s28, 3
      %p401 = pnand %p399, %p400
      %p402 = pneg %p401
      // Predicated region
      $region61: #{tpu_custom_call.1} parent=5 // pred_check
        _
      $region62: #{tpu_custom_call.1} parent=5 // pred_check_branch
        %404 = sbr.rel (%p401) target = $region64
      $region63: #{tpu_custom_call.1} parent=5 // pred_region
        %s405 = ssub.s32 %s28, 1
        %s406 = sand.u32 %s41, 1
        %s407 = scalar_lea.sflag [#allocation4], %s406
        %s408 = sand.u32 %s41, 1
        %s409 = smul.addr %s408, 2
        %s410 = scalar_lea.vmem [#allocation3], %s409
        // Predicated region
        $region65: #{tpu_custom_call.1} parent=63 // pred_check
          %p411 = pneg %p54
        $region66: #{tpu_custom_call.1} parent=63 // pred_check_branch
          %413 = sbr.rel (%p411) target = $region68
        $region67: #{tpu_custom_call.1} parent=63 // pred_region
          %414 = dma.done %s407, 32
        $region68: #{tpu_custom_call.1} parent=63 // pred_fallthru
          _
        %s415 = sand.u32 %s33, 1
        %s416 = scalar_lea.sflag [#allocation7], %s415
        %s417 = sand.u32 %s67, 1
        %s418 = smul.addr %s417, 2
        %s419 = scalar_lea.vmem [#allocation6], %s418
        // Predicated region
        $region69: #{tpu_custom_call.1} parent=63 // pred_check
          %p420 = pneg %p80
        $region70: #{tpu_custom_call.1} parent=63 // pred_check_branch
          %422 = sbr.rel (%p420) target = $region72
        $region71: #{tpu_custom_call.1} parent=63 // pred_region
          %423 = dma.done %s416, 32
        $region72: #{tpu_custom_call.1} parent=63 // pred_fallthru
          _
        // Predicated region
        $region73: #{tpu_custom_call.1} parent=63 // pred_check
          %p424 = pneg %p143
        $region74: #{tpu_custom_call.1} parent=63 // pred_check_branch
          %426 = sbr.rel (%p424) target = $region76
        $region75: #{tpu_custom_call.1} parent=63 // pred_region
          %427 = dma.done [#allocation7], 256
        $region76: #{tpu_custom_call.1} parent=63 // pred_fallthru
          _
        // Predicated region
        $region77: #{tpu_custom_call.1} parent=63 // pred_check
          %p428 = pneg %p164
        $region78: #{tpu_custom_call.1} parent=63 // pred_check_branch
          %430 = sbr.rel (%p428) target = $region80
        $region79: #{tpu_custom_call.1} parent=63 // pred_region
          %431 = dma.done [#allocation10], 256
        $region80: #{tpu_custom_call.1} parent=63 // pred_fallthru
          _
        %s432 = sand.u32 %s41, 1
        %s433 = scalar_lea.sflag [#allocation4], %s432
        %s434 = sand.u32 %s41, 1
        %s435 = smul.addr %s434, 2
        %s436 = scalar_lea.vmem [#allocation3], %s435
        %p437 = pneg %p54
        %p438 = pneg %p51
        %s439 = sand.u32 %s33, 1
        %s440 = scalar_lea.sflag [#allocation7], %s439
        %s441 = sand.u32 %s67, 1
        %s442 = smul.addr %s441, 2
        %s443 = scalar_lea.vmem [#allocation6], %s442
        %p444 = pneg %p80
        %p445 = pneg %p77
        %p446 = pneg %p101
        %p447 = pneg %p98
        %p448 = pneg %p122
        %p449 = pneg %p119
        %p450 = pneg %p143
        %p451 = pneg %p140
        %p452 = pneg %p164
        %p453 = pneg %p161
        %p454 = pneg %p185
        %p455 = pneg %p182
        %p456 = pneg %p206
        %p457 = pneg %p203
        %p458 = pneg %p227
        %p459 = pneg %p224
        %p460 = pneg %p248
        %p461 = pneg %p245
        %p462 = pneg %p269
        %p463 = pneg %p266
        %p464 = pneg %p295
        %p465 = pneg %p292
        %s466 = sand.u32 %s282, 1
        %s467 = scalar_lea.sflag [#allocation5], %s466
        %s468 = sand.u32 %s282, 1
        %s469 = smul.addr %s468, 2
        %s470 = scalar_lea.vmem [#allocation11], %s469
        %s471 = smul.u32 2, %s33
        %s472 = smul.u32 2, %s33
        %s473 = smul.u32 2, %s33
        %v474 = vld [vmem:[%s2] sm:$0xff]
        %v475 = vld [vmem:[%s2 + $0x8] sm:$0xff]
        %v476 = vld [vmem:[%s410] sm:$0x3]
        %v477 = vlaneseq
        %v478 = vshrl.u32 %v477, 7
        %v479 = vadd.s32 %v478, 8
        %v480 = vadd.s32 %v478, 16
        %v481 = vadd.s32 %v478, 24
        %v482 = vadd.s32 %v478, 32
        %v483 = vadd.s32 %v478, 40
        %v484 = vadd.s32 %v478, 48
        %v485 = vadd.s32 %v478, 56
        %v486 = vadd.s32 %v478, 64
        %v487 = vadd.s32 %v478, 72
        %v488 = vadd.s32 %v478, 80
        %v489 = vadd.s32 %v478, 88
        %v490 = vadd.s32 %v478, 96
        %v491 = vadd.s32 %v478, 104
        %v492 = vadd.s32 %v478, 112
        %v493 = vadd.s32 %v478, 120
        %v494 = vlaneseq
        %v495 = vshrl.u32 %v494, 7
        %v496 = vsub.s32 0, %v495
        %v497 = vrot.slane %v476, %v496
        %v498 = vlaneseq
        %v499 = vshrl.u32 %v498, 7
        %v500 = vsub.s32 1, %v499
        %v501 = vrot.slane %v476, %v500
        %vm502 = vcmp.eq.s32.totalorder %v478, %v497
        %vm503 = vcmp.eq.s32.totalorder %v478, %v501
        %vm504 = vcmp.eq.s32.totalorder %v479, %v497
        %vm505 = vcmp.eq.s32.totalorder %v479, %v501
        %vm506 = vcmp.eq.s32.totalorder %v480, %v497
        %vm507 = vcmp.eq.s32.totalorder %v480, %v501
        %vm508 = vcmp.eq.s32.totalorder %v481, %v497
        %vm509 = vcmp.eq.s32.totalorder %v481, %v501
        %vm510 = vcmp.eq.s32.totalorder %v482, %v497
        %vm511 = vcmp.eq.s32.totalorder %v482, %v501
        %vm512 = vcmp.eq.s32.totalorder %v483, %v497
        %vm513 = vcmp.eq.s32.totalorder %v483, %v501
        %vm514 = vcmp.eq.s32.totalorder %v484, %v497
        %vm515 = vcmp.eq.s32.totalorder %v484, %v501
        %vm516 = vcmp.eq.s32.totalorder %v485, %v497
        %vm517 = vcmp.eq.s32.totalorder %v485, %v501
        %vm518 = vcmp.eq.s32.totalorder %v486, %v497
        %vm519 = vcmp.eq.s32.totalorder %v486, %v501
        %vm520 = vcmp.eq.s32.totalorder %v487, %v497
        %vm521 = vcmp.eq.s32.totalorder %v487, %v501
        %vm522 = vcmp.eq.s32.totalorder %v488, %v497
        %vm523 = vcmp.eq.s32.totalorder %v488, %v501
        %vm524 = vcmp.eq.s32.totalorder %v489, %v497
        %vm525 = vcmp.eq.s32.totalorder %v489, %v501
        %vm526 = vcmp.eq.s32.totalorder %v490, %v497
        %vm527 = vcmp.eq.s32.totalorder %v490, %v501
        %vm528 = vcmp.eq.s32.totalorder %v491, %v497
        %vm529 = vcmp.eq.s32.totalorder %v491, %v501
        %vm530 = vcmp.eq.s32.totalorder %v492, %v497
        %vm531 = vcmp.eq.s32.totalorder %v492, %v501
        %vm532 = vcmp.eq.s32.totalorder %v493, %v497
        %vm533 = vcmp.eq.s32.totalorder %v493, %v501
        %v534 = vsel %vm502, 1.0, 0.0
        %v535 = vsel %vm503, 1.0, 0.0
        %v536 = vsel %vm504, 1.0, 0.0
        %v537 = vsel %vm505, 1.0, 0.0
        %v538 = vsel %vm506, 1.0, 0.0
        %v539 = vsel %vm507, 1.0, 0.0
        %v540 = vsel %vm508, 1.0, 0.0
        %v541 = vsel %vm509, 1.0, 0.0
        %v542 = vsel %vm510, 1.0, 0.0
        %v543 = vsel %vm511, 1.0, 0.0
        %v544 = vsel %vm512, 1.0, 0.0
        %v545 = vsel %vm513, 1.0, 0.0
        %v546 = vsel %vm514, 1.0, 0.0
        %v547 = vsel %vm515, 1.0, 0.0
        %v548 = vsel %vm516, 1.0, 0.0
        %v549 = vsel %vm517, 1.0, 0.0
        %v550 = vsel %vm518, 1.0, 0.0
        %v551 = vsel %vm519, 1.0, 0.0
        %v552 = vsel %vm520, 1.0, 0.0
        %v553 = vsel %vm521, 1.0, 0.0
        %v554 = vsel %vm522, 1.0, 0.0
        %v555 = vsel %vm523, 1.0, 0.0
        %v556 = vsel %vm524, 1.0, 0.0
        %v557 = vsel %vm525, 1.0, 0.0
        %v558 = vsel %vm526, 1.0, 0.0
        %v559 = vsel %vm527, 1.0, 0.0
        %v560 = vsel %vm528, 1.0, 0.0
        %v561 = vsel %vm529, 1.0, 0.0
        %v562 = vsel %vm530, 1.0, 0.0
        %v563 = vsel %vm531, 1.0, 0.0
        %v564 = vsel %vm532, 1.0, 0.0
        %v565 = vsel %vm533, 1.0, 0.0
        %566 = vmatprep.subr.mxu0 %v535
        %567 = vmatpush1.msra.mxu0 %v534
        %568 = vmatprep.subr.mxu0 %v537
        %569 = vmatpush1.msra.mxu0 %v536
        %570 = vmatprep.subr.mxu0 %v539
        %571 = vmatpush1.msra.mxu0 %v538
        %572 = vmatprep.subr.mxu0 %v541
        %573 = vmatpush1.msra.mxu0 %v540
        %574 = vmatprep.subr.mxu0 %v543
        %575 = vmatpush1.msra.mxu0 %v542
        %576 = vmatprep.subr.mxu0 %v545
        %577 = vmatpush1.msra.mxu0 %v544
        %578 = vmatprep.subr.mxu0 %v547
        %579 = vmatpush1.msra.mxu0 %v546
        %580 = vmatprep.subr.mxu0 %v549
        %581 = vmatpush1.msra.mxu0 %v548
        %582 = vmatprep.subr.mxu0 %v551
        %583 = vmatpush1.msra.mxu0 %v550
        %584 = vmatprep.subr.mxu0 %v553
        %585 = vmatpush1.msra.mxu0 %v552
        %586 = vmatprep.subr.mxu0 %v555
        %587 = vmatpush1.msra.mxu0 %v554
        %588 = vmatprep.subr.mxu0 %v557
        %589 = vmatpush1.msra.mxu0 %v556
        %590 = vmatprep.subr.mxu0 %v559
        %591 = vmatpush1.msra.mxu0 %v558
        %592 = vmatprep.subr.mxu0 %v561
        %593 = vmatpush1.msra.mxu0 %v560
        %594 = vmatprep.subr.mxu0 %v563
        %595 = vmatpush1.msra.mxu0 %v562
        %596 = vmatprep.subr.mxu0 %v565
        %597 = vmatpush1.msra.mxu0 %v564
        %598 = vmatprep.subr.mxu0 0.0
        %599 = vmatpush1.msra.mxu0 0.0
        %600 = vmatprep.subr.mxu0 0.0
        %601 = vmatpush1.msra.mxu0 0.0
        %602 = vmatprep.subr.mxu0 0.0
        %603 = vmatpush1.msra.mxu0 0.0
        %604 = vmatprep.subr.mxu0 0.0
        %605 = vmatpush1.msra.mxu0 0.0
        %606 = vmatprep.subr.mxu0 0.0
        %607 = vmatpush1.msra.mxu0 0.0
        %608 = vmatprep.subr.mxu0 0.0
        %609 = vmatpush1.msra.mxu0 0.0
        %610 = vmatprep.subr.mxu0 0.0
        %611 = vmatpush1.msra.mxu0 0.0
        %612 = vmatprep.subr.mxu0 0.0
        %613 = vmatpush1.msra.mxu0 0.0
        %614 = vmatprep.subr.mxu0 0.0
        %615 = vmatpush1.msra.mxu0 0.0
        %616 = vmatprep.subr.mxu0 0.0
        %617 = vmatpush1.msra.mxu0 0.0
        %618 = vmatprep.subr.mxu0 0.0
        %619 = vmatpush1.msra.mxu0 0.0
        %620 = vmatprep.subr.mxu0 0.0
        %621 = vmatpush1.msra.mxu0 0.0
        %622 = vmatprep.subr.mxu0 0.0
        %623 = vmatpush1.msra.mxu0 0.0
        %624 = vmatprep.subr.mxu0 0.0
        %625 = vmatpush1.msra.mxu0 0.0
        %626 = vmatprep.subr.mxu0 0.0
        %627 = vmatpush1.msra.mxu0 0.0
        %628 = vmatprep.subr.mxu0 0.0
        %629 = vmatpush1.msra.mxu0 0.0
        %630 = vmatprep.mubr.f32.mxu0 0.0
        %631 = vmatmul.mubr.f32.gmra.mrb[0].mxu0 %v474
        %v632 = vpop.f32.mrb[0].mxu0
        %v633 = vadd.f32 0.0, %v632
        %v634 = vpop.f32.mrb[0].mxu0
        %v635 = vadd.f32 0.0, %v634
        %636 = vmatprep.mubr.f32.mxu0 0.0
        %637 = vmatmul.mubr.f32.gmra.mrb[0].mxu0 %v475
        %v638 = vpop.f32.mrb[0].mxu0
        %v639 = vadd.f32 0.0, %v638
        %v640 = vpop.f32.mrb[0].mxu0
        %v641 = vadd.f32 0.0, %v640
        %642 = vdwg.mxu0
        %v643 = vld [vmem:[%s3] sm:$0xff]
        %v644 = vld [vmem:[%s3 + $0x8] sm:$0xff]
        %v645 = vld [vmem:[%s3 + $0x10] sm:$0xff]
        %v646 = vld [vmem:[%s3 + $0x18] sm:$0xff]
        %v647 = vld [vmem:[%s419] sm:$0x3]
        %v648 = vadd.s32 %v478, 128
        %v649 = vadd.s32 %v478, 136
        %v650 = vadd.s32 %v478, 144
        %v651 = vadd.s32 %v478, 152
        %v652 = vadd.s32 %v478, 160
        %v653 = vadd.s32 %v478, 168
        %v654 = vadd.s32 %v478, 176
        %v655 = vadd.s32 %v478, 184
        %v656 = vadd.s32 %v478, 192
        %v657 = vadd.s32 %v478, 200
        %v658 = vadd.s32 %v478, 208
        %v659 = vadd.s32 %v478, 216
        %v660 = vadd.s32 %v478, 224
        %v661 = vadd.s32 %v478, 232
        %v662 = vadd.s32 %v478, 240
        %v663 = vadd.s32 %v478, 248
        %v664 = vlaneseq
        %v665 = vshrl.u32 %v664, 7
        %v666 = vsub.s32 0, %v665
        %v667 = vrot.slane %v647, %v666
        %v668 = vlaneseq
        %v669 = vshrl.u32 %v668, 7
        %v670 = vsub.s32 1, %v669
        %v671 = vrot.slane %v647, %v670
        %vm672 = vcmp.eq.s32.totalorder %v478, %v667
        %vm673 = vcmp.eq.s32.totalorder %v478, %v671
        %vm674 = vcmp.eq.s32.totalorder %v479, %v667
        %vm675 = vcmp.eq.s32.totalorder %v479, %v671
        %vm676 = vcmp.eq.s32.totalorder %v480, %v667
        %vm677 = vcmp.eq.s32.totalorder %v480, %v671
        %vm678 = vcmp.eq.s32.totalorder %v481, %v667
        %vm679 = vcmp.eq.s32.totalorder %v481, %v671
        %vm680 = vcmp.eq.s32.totalorder %v482, %v667
        %vm681 = vcmp.eq.s32.totalorder %v482, %v671
        %vm682 = vcmp.eq.s32.totalorder %v483, %v667
        %vm683 = vcmp.eq.s32.totalorder %v483, %v671
        %vm684 = vcmp.eq.s32.totalorder %v484, %v667
        %vm685 = vcmp.eq.s32.totalorder %v484, %v671
        %vm686 = vcmp.eq.s32.totalorder %v485, %v667
        %vm687 = vcmp.eq.s32.totalorder %v485, %v671
        %vm688 = vcmp.eq.s32.totalorder %v486, %v667
        %vm689 = vcmp.eq.s32.totalorder %v486, %v671
        %vm690 = vcmp.eq.s32.totalorder %v487, %v667
        %vm691 = vcmp.eq.s32.totalorder %v487, %v671
        %vm692 = vcmp.eq.s32.totalorder %v488, %v667
        %vm693 = vcmp.eq.s32.totalorder %v488, %v671
        %vm694 = vcmp.eq.s32.totalorder %v489, %v667
        %vm695 = vcmp.eq.s32.totalorder %v489, %v671
        %vm696 = vcmp.eq.s32.totalorder %v490, %v667
        %vm697 = vcmp.eq.s32.totalorder %v490, %v671
        %vm698 = vcmp.eq.s32.totalorder %v491, %v667
        %vm699 = vcmp.eq.s32.totalorder %v491, %v671
        %vm700 = vcmp.eq.s32.totalorder %v492, %v667
        %vm701 = vcmp.eq.s32.totalorder %v492, %v671
        %vm702 = vcmp.eq.s32.totalorder %v493, %v667
        %vm703 = vcmp.eq.s32.totalorder %v493, %v671
        %vm704 = vcmp.eq.s32.totalorder %v648, %v667
        %vm705 = vcmp.eq.s32.totalorder %v648, %v671
        %vm706 = vcmp.eq.s32.totalorder %v649, %v667
        %vm707 = vcmp.eq.s32.totalorder %v649, %v671
        %vm708 = vcmp.eq.s32.totalorder %v650, %v667
        %vm709 = vcmp.eq.s32.totalorder %v650, %v671
        %vm710 = vcmp.eq.s32.totalorder %v651, %v667
        %vm711 = vcmp.eq.s32.totalorder %v651, %v671
        %vm712 = vcmp.eq.s32.totalorder %v652, %v667
        %vm713 = vcmp.eq.s32.totalorder %v652, %v671
        %vm714 = vcmp.eq.s32.totalorder %v653, %v667
        %vm715 = vcmp.eq.s32.totalorder %v653, %v671
        %vm716 = vcmp.eq.s32.totalorder %v654, %v667
        %vm717 = vcmp.eq.s32.totalorder %v654, %v671
        %vm718 = vcmp.eq.s32.totalorder %v655, %v667
        %vm719 = vcmp.eq.s32.totalorder %v655, %v671
        %vm720 = vcmp.eq.s32.totalorder %v656, %v667
        %vm721 = vcmp.eq.s32.totalorder %v656, %v671
        %vm722 = vcmp.eq.s32.totalorder %v657, %v667
        %vm723 = vcmp.eq.s32.totalorder %v657, %v671
        %vm724 = vcmp.eq.s32.totalorder %v658, %v667
        %vm725 = vcmp.eq.s32.totalorder %v658, %v671
        %vm726 = vcmp.eq.s32.totalorder %v659, %v667
        %vm727 = vcmp.eq.s32.totalorder %v659, %v671
        %vm728 = vcmp.eq.s32.totalorder %v660, %v667
        %vm729 = vcmp.eq.s32.totalorder %v660, %v671
        %vm730 = vcmp.eq.s32.totalorder %v661, %v667
        %vm731 = vcmp.eq.s32.totalorder %v661, %v671
        %vm732 = vcmp.eq.s32.totalorder %v662, %v667
        %vm733 = vcmp.eq.s32.totalorder %v662, %v671
        %vm734 = vcmp.eq.s32.totalorder %v663, %v667
        %vm735 = vcmp.eq.s32.totalorder %v663, %v671
        %v736 = vsel %vm672, 1.0, 0.0
        %v737 = vsel %vm673, 1.0, 0.0
        %v738 = vsel %vm674, 1.0, 0.0
        %v739 = vsel %vm675, 1.0, 0.0
        %v740 = vsel %vm676, 1.0, 0.0
        %v741 = vsel %vm677, 1.0, 0.0
        %v742 = vsel %vm678, 1.0, 0.0
        %v743 = vsel %vm679, 1.0, 0.0
        %v744 = vsel %vm680, 1.0, 0.0
        %v745 = vsel %vm681, 1.0, 0.0
        %v746 = vsel %vm682, 1.0, 0.0
        %v747 = vsel %vm683, 1.0, 0.0
        %v748 = vsel %vm684, 1.0, 0.0
        %v749 = vsel %vm685, 1.0, 0.0
        %v750 = vsel %vm686, 1.0, 0.0
        %v751 = vsel %vm687, 1.0, 0.0
        %v752 = vsel %vm688, 1.0, 0.0
        %v753 = vsel %vm689, 1.0, 0.0
        %v754 = vsel %vm690, 1.0, 0.0
        %v755 = vsel %vm691, 1.0, 0.0
        %v756 = vsel %vm692, 1.0, 0.0
        %v757 = vsel %vm693, 1.0, 0.0
        %v758 = vsel %vm694, 1.0, 0.0
        %v759 = vsel %vm695, 1.0, 0.0
        %v760 = vsel %vm696, 1.0, 0.0
        %v761 = vsel %vm697, 1.0, 0.0
        %v762 = vsel %vm698, 1.0, 0.0
        %v763 = vsel %vm699, 1.0, 0.0
        %v764 = vsel %vm700, 1.0, 0.0
        %v765 = vsel %vm701, 1.0, 0.0
        %v766 = vsel %vm702, 1.0, 0.0
        %v767 = vsel %vm703, 1.0, 0.0
        %v768 = vsel %vm704, 1.0, 0.0
        %v769 = vsel %vm705, 1.0, 0.0
        %v770 = vsel %vm706, 1.0, 0.0
        %v771 = vsel %vm707, 1.0, 0.0
        %v772 = vsel %vm708, 1.0, 0.0
        %v773 = vsel %vm709, 1.0, 0.0
        %v774 = vsel %vm710, 1.0, 0.0
        %v775 = vsel %vm711, 1.0, 0.0
        %v776 = vsel %vm712, 1.0, 0.0
        %v777 = vsel %vm713, 1.0, 0.0
        %v778 = vsel %vm714, 1.0, 0.0
        %v779 = vsel %vm715, 1.0, 0.0
        %v780 = vsel %vm716, 1.0, 0.0
        %v781 = vsel %vm717, 1.0, 0.0
        %v782 = vsel %vm718, 1.0, 0.0
        %v783 = vsel %vm719, 1.0, 0.0
        %v784 = vsel %vm720, 1.0, 0.0
        %v785 = vsel %vm721, 1.0, 0.0
        %v786 = vsel %vm722, 1.0, 0.0
        %v787 = vsel %vm723, 1.0, 0.0
        %v788 = vsel %vm724, 1.0, 0.0
        %v789 = vsel %vm725, 1.0, 0.0
        %v790 = vsel %vm726, 1.0, 0.0
        %v791 = vsel %vm727, 1.0, 0.0
        %v792 = vsel %vm728, 1.0, 0.0
        %v793 = vsel %vm729, 1.0, 0.0
        %v794 = vsel %vm730, 1.0, 0.0
        %v795 = vsel %vm731, 1.0, 0.0
        %v796 = vsel %vm732, 1.0, 0.0
        %v797 = vsel %vm733, 1.0, 0.0
        %v798 = vsel %vm734, 1.0, 0.0
        %v799 = vsel %vm735, 1.0, 0.0
        %800 = vmatprep.subr.mxu0 %v737
        %801 = vmatpush1.msra.mxu0 %v736
        %802 = vmatprep.subr.mxu0 %v739
        %803 = vmatpush1.msra.mxu0 %v738
        %804 = vmatprep.subr.mxu0 %v741
        %805 = vmatpush1.msra.mxu0 %v740
        %806 = vmatprep.subr.mxu0 %v743
        %807 = vmatpush1.msra.mxu0 %v742
        %808 = vmatprep.subr.mxu0 %v745
        %809 = vmatpush1.msra.mxu0 %v744
        %810 = vmatprep.subr.mxu0 %v747
        %811 = vmatpush1.msra.mxu0 %v746
        %812 = vmatprep.subr.mxu0 %v749
        %813 = vmatpush1.msra.mxu0 %v748
        %814 = vmatprep.subr.mxu0 %v751
        %815 = vmatpush1.msra.mxu0 %v750
        %816 = vmatprep.subr.mxu0 %v753
        %817 = vmatpush1.msra.mxu0 %v752
        %818 = vmatprep.subr.mxu0 %v755
        %819 = vmatpush1.msra.mxu0 %v754
        %820 = vmatprep.subr.mxu0 %v757
        %821 = vmatpush1.msra.mxu0 %v756
        %822 = vmatprep.subr.mxu0 %v759
        %823 = vmatpush1.msra.mxu0 %v758
        %824 = vmatprep.subr.mxu0 %v761
        %825 = vmatpush1.msra.mxu0 %v760
        %826 = vmatprep.subr.mxu0 %v763
        %827 = vmatpush1.msra.mxu0 %v762
        %828 = vmatprep.subr.mxu0 %v765
        %829 = vmatpush1.msra.mxu0 %v764
        %830 = vmatprep.subr.mxu0 %v767
        %831 = vmatpush1.msra.mxu0 %v766
        %832 = vmatprep.subr.mxu0 %v769
        %833 = vmatpush1.msra.mxu0 %v768
        %834 = vmatprep.subr.mxu0 %v771
        %835 = vmatpush1.msra.mxu0 %v770
        %836 = vmatprep.subr.mxu0 %v773
        %837 = vmatpush1.msra.mxu0 %v772
        %838 = vmatprep.subr.mxu0 %v775
        %839 = vmatpush1.msra.mxu0 %v774
        %840 = vmatprep.subr.mxu0 %v777
        %841 = vmatpush1.msra.mxu0 %v776
        %842 = vmatprep.subr.mxu0 %v779
        %843 = vmatpush1.msra.mxu0 %v778
        %844 = vmatprep.subr.mxu0 %v781
        %845 = vmatpush1.msra.mxu0 %v780
        %846 = vmatprep.subr.mxu0 %v783
        %847 = vmatpush1.msra.mxu0 %v782
        %848 = vmatprep.subr.mxu0 %v785
        %849 = vmatpush1.msra.mxu0 %v784
        %850 = vmatprep.subr.mxu0 %v787
        %851 = vmatpush1.msra.mxu0 %v786
        %852 = vmatprep.subr.mxu0 %v789
        %853 = vmatpush1.msra.mxu0 %v788
        %854 = vmatprep.subr.mxu0 %v791
        %855 = vmatpush1.msra.mxu0 %v790
        %856 = vmatprep.subr.mxu0 %v793
        %857 = vmatpush1.msra.mxu0 %v792
        %858 = vmatprep.subr.mxu0 %v795
        %859 = vmatpush1.msra.mxu0 %v794
        %860 = vmatprep.subr.mxu0 %v797
        %861 = vmatpush1.msra.mxu0 %v796
        %862 = vmatprep.subr.mxu0 %v799
        %863 = vmatpush1.msra.mxu0 %v798
        %864 = vmatprep.mubr.f32.mxu0 %v644
        %865 = vmatmul.mubr.f32.gmra.mrb[0].mxu0 %v643
        %v866 = vpop.f32.mrb[0].mxu0
        %v867 = vadd.f32 0.0, %v866
        %v868 = vpop.f32.mrb[0].mxu0
        %v869 = vadd.f32 0.0, %v868
        %870 = vmatprep.mubr.f32.mxu0 %v646
        %871 = vmatmul.mubr.f32.gmra.mrb[0].mxu0 %v645
        %v872 = vpop.f32.mrb[0].mxu0
        %v873 = vadd.f32 0.0, %v872
        %v874 = vpop.f32.mrb[0].mxu0
        %v875 = vadd.f32 0.0, %v874
        %876 = vdwg.mxu0
        %v877 = vld [vmem:[#allocation8] sm:$0xff]
        %v878 = vld [vmem:[#allocation8 + $0x8] sm:$0xff]
        %v879 = vld [vmem:[#allocation9] sm:$0xff]
        %v880 = vld [vmem:[#allocation9 + $0x8] sm:$0xff]
        %vm881 = vcmask 130048
        %v883 = vsel %vm881, %v879, 0
        %v886 = vsel %vm881, %v880, 0
        %888 = vmatprep.subr.mxu0 %v869
        %889 = vmatpush1.msra.mxu0 %v867
        %890 = vmatprep.subr.mxu0 %v875
        %891 = vmatpush1.msra.mxu0 %v873
        %892 = vmatprep.subr.mxu0 0.0
        %893 = vmatpush1.msra.mxu0 0.0
        %894 = vmatprep.subr.mxu0 0.0
        %895 = vmatpush1.msra.mxu0 0.0
        %896 = vmatprep.subr.mxu0 0.0
        %897 = vmatpush1.msra.mxu0 0.0
        %898 = vmatprep.subr.mxu0 0.0
        %899 = vmatpush1.msra.mxu0 0.0
        %900 = vmatprep.subr.mxu0 0.0
        %901 = vmatpush1.msra.mxu0 0.0
        %902 = vmatprep.subr.mxu0 0.0
        %903 = vmatpush1.msra.mxu0 0.0
        %904 = vmatprep.subr.mxu0 0.0
        %905 = vmatpush1.msra.mxu0 0.0
        %906 = vmatprep.subr.mxu0 0.0
        %907 = vmatpush1.msra.mxu0 0.0
        %908 = vmatprep.subr.mxu0 0.0
        %909 = vmatpush1.msra.mxu0 0.0
        %910 = vmatprep.subr.mxu0 0.0
        %911 = vmatpush1.msra.mxu0 0.0
        %912 = vmatprep.subr.mxu0 0.0
        %913 = vmatpush1.msra.mxu0 0.0
        %914 = vmatprep.subr.mxu0 0.0
        %915 = vmatpush1.msra.mxu0 0.0
        %916 = vmatprep.subr.mxu0 0.0
        %917 = vmatpush1.msra.mxu0 0.0
        %918 = vmatprep.subr.mxu0 0.0
        %919 = vmatpush1.msra.mxu0 0.0
        %920 = vmatprep.subr.mxu0 0.0
        %921 = vmatpush1.msra.mxu0 0.0
        %922 = vmatprep.subr.mxu0 0.0
        %923 = vmatpush1.msra.mxu0 0.0
        %924 = vmatprep.subr.mxu0 0.0
        %925 = vmatpush1.msra.mxu0 0.0
        %926 = vmatprep.subr.mxu0 0.0
        %927 = vmatpush1.msra.mxu0 0.0
        %928 = vmatprep.subr.mxu0 0.0
        %929 = vmatpush1.msra.mxu0 0.0
        %930 = vmatprep.subr.mxu0 0.0
        %931 = vmatpush1.msra.mxu0 0.0
        %932 = vmatprep.subr.mxu0 0.0
        %933 = vmatpush1.msra.mxu0 0.0
        %934 = vmatprep.subr.mxu0 0.0
        %935 = vmatpush1.msra.mxu0 0.0
        %936 = vmatprep.subr.mxu0 0.0
        %937 = vmatpush1.msra.mxu0 0.0
        %938 = vmatprep.subr.mxu0 0.0
        %939 = vmatpush1.msra.mxu0 0.0
        %940 = vmatprep.subr.mxu0 0.0
        %941 = vmatpush1.msra.mxu0 0.0
        %942 = vmatprep.subr.mxu0 0.0
        %943 = vmatpush1.msra.mxu0 0.0
        %944 = vmatprep.subr.mxu0 0.0
        %945 = vmatpush1.msra.mxu0 0.0
        %946 = vmatprep.subr.mxu0 0.0
        %947 = vmatpush1.msra.mxu0 0.0
        %948 = vmatprep.subr.mxu0 0.0
        %949 = vmatpush1.msra.mxu0 0.0
        %950 = vmatprep.subr.mxu0 0.0
        %951 = vmatpush1.msra.mxu0 0.0
        %952 = vmatprep.mubr.f32.mxu0 0.0
        %953 = vmatmul.mubr.f32.gmra.mrb[0].mxu0 %v883
        %v954 = vpop.f32.mrb[0].mxu0
        %v955 = vadd.f32 0.0, %v954
        %v956 = vpop.f32.mrb[0].mxu0
        %v957 = vadd.f32 0.0, %v956
        %958 = vmatprep.mubr.f32.mxu0 0.0
        %959 = vmatmul.mubr.f32.gmra.mrb[0].mxu0 %v886
        %v960 = vpop.f32.mrb[0].mxu0
        %v961 = vadd.f32 0.0, %v960
        %v962 = vpop.f32.mrb[0].mxu0
        %v963 = vadd.f32 0.0, %v962
        %964 = vdwg.mxu0
        %v966 = vsel %vm881, %v877, 0
        %v969 = vsel %vm881, %v878, 0
        %971 = vmatprep.subr.mxu0 %v635
        %972 = vmatpush1.msra.mxu0 %v633
        %973 = vmatprep.subr.mxu0 %v641
        %974 = vmatpush1.msra.mxu0 %v639
        %975 = vmatprep.subr.mxu0 0.0
        %976 = vmatpush1.msra.mxu0 0.0
        %977 = vmatprep.subr.mxu0 0.0
        %978 = vmatpush1.msra.mxu0 0.0
        %979 = vmatprep.subr.mxu0 0.0
        %980 = vmatpush1.msra.mxu0 0.0
        %981 = vmatprep.subr.mxu0 0.0
        %982 = vmatpush1.msra.mxu0 0.0
        %983 = vmatprep.subr.mxu0 0.0
        %984 = vmatpush1.msra.mxu0 0.0
        %985 = vmatprep.subr.mxu0 0.0
        %986 = vmatpush1.msra.mxu0 0.0
        %987 = vmatprep.subr.mxu0 0.0
        %988 = vmatpush1.msra.mxu0 0.0
        %989 = vmatprep.subr.mxu0 0.0
        %990 = vmatpush1.msra.mxu0 0.0
        %991 = vmatprep.subr.mxu0 0.0
        %992 = vmatpush1.msra.mxu0 0.0
        %993 = vmatprep.subr.mxu0 0.0
        %994 = vmatpush1.msra.mxu0 0.0
        %995 = vmatprep.subr.mxu0 0.0
        %996 = vmatpush1.msra.mxu0 0.0
        %997 = vmatprep.subr.mxu0 0.0
        %998 = vmatpush1.msra.mxu0 0.0
        %999 = vmatprep.subr.mxu0 0.0
        %1000 = vmatpush1.msra.mxu0 0.0
        %1001 = vmatprep.subr.mxu0 0.0
        %1002 = vmatpush1.msra.mxu0 0.0
        %1003 = vmatprep.subr.mxu0 0.0
        %1004 = vmatpush1.msra.mxu0 0.0
        %1005 = vmatprep.subr.mxu0 0.0
        %1006 = vmatpush1.msra.mxu0 0.0
        %1007 = vmatprep.subr.mxu0 0.0
        %1008 = vmatpush1.msra.mxu0 0.0
        %1009 = vmatprep.subr.mxu0 0.0
        %1010 = vmatpush1.msra.mxu0 0.0
        %1011 = vmatprep.subr.mxu0 0.0
        %1012 = vmatpush1.msra.mxu0 0.0
        %1013 = vmatprep.subr.mxu0 0.0
        %1014 = vmatpush1.msra.mxu0 0.0
        %1015 = vmatprep.subr.mxu0 0.0
        %1016 = vmatpush1.msra.mxu0 0.0
        %1017 = vmatprep.subr.mxu0 0.0
        %1018 = vmatpush1.msra.mxu0 0.0
        %1019 = vmatprep.subr.mxu0 0.0
        %1020 = vmatpush1.msra.mxu0 0.0
        %1021 = vmatprep.subr.mxu0 0.0
        %1022 = vmatpush1.msra.mxu0 0.0
        %1023 = vmatprep.subr.mxu0 0.0
        %1024 = vmatpush1.msra.mxu0 0.0
        %1025 = vmatprep.subr.mxu0 0.0
        %1026 = vmatpush1.msra.mxu0 0.0
        %1027 = vmatprep.subr.mxu0 0.0
        %1028 = vmatpush1.msra.mxu0 0.0
        %1029 = vmatprep.subr.mxu0 0.0
        %1030 = vmatpush1.msra.mxu0 0.0
        %1031 = vmatprep.subr.mxu0 0.0
        %1032 = vmatpush1.msra.mxu0 0.0
        %1033 = vmatprep.subr.mxu0 0.0
        %1034 = vmatpush1.msra.mxu0 0.0
        %1035 = vmatprep.mubr.f32.mxu0 0.0
        %1036 = vmatmul.mubr.f32.gmra.mrb[0].mxu0 %v966
        %v1037 = vpop.f32.mrb[0].mxu0
        %v1038 = vadd.f32 %v955, %v1037
        %v1039 = vpop.f32.mrb[0].mxu0
        %v1040 = vadd.f32 %v957, %v1039
        %1041 = vmatprep.mubr.f32.mxu0 0.0
        %1042 = vmatmul.mubr.f32.gmra.mrb[0].mxu0 %v969
        %v1043 = vpop.f32.mrb[0].mxu0
        %v1044 = vadd.f32 %v961, %v1043
        %v1045 = vpop.f32.mrb[0].mxu0
        %v1046 = vadd.f32 %v963, %v1045
        %1047 = vdwg.mxu0
        %v1048 = vld [vmem:[%s6] sm:$0xff]
        %v1049 = vld [vmem:[%s6 + $0x8] sm:$0xff]
        %1051 = vset.pattern.permute.xlu0 0
        %1052 = vperm.xlu0 %1051, %v1048
        %v1053 = vpop.permute.xlu0 %1052
        %1056 = vset.pattern.permute.xlu0 0
        %1057 = vperm.xlu0 %1056, %v1049
        %v1058 = vpop.permute.xlu0 %1057
        %v1060 = vadd.f32 %v1038, %v1053
        %v1061 = vadd.f32 %v1040, %v1053
        %v1062 = vadd.f32 %v1044, %v1058
        %v1063 = vadd.f32 %v1046, %v1058
        %v1064 = vmax.f32 %v1060, 0.0
        %v1065 = vmax.f32 %v1061, 0.0
        %v1066 = vmax.f32 %v1062, 0.0
        %v1067 = vmax.f32 %v1063, 0.0
        %v1068 = vld [vmem:[%s7] sm:$0xff]
        %v1069 = vld [vmem:[%s8] sm:$0xff]
        %1071 = vset.pattern.permute.xlu0 0
        %1072 = vperm.xlu0 %1071, %v1069
        %v1073 = vpop.permute.xlu0 %1072
        %v1076 = vsel %vm881, %v1068, 0
        %1078 = vmatprep.subr.mxu0 %v1065
        %1079 = vmatpush1.msra.mxu0 %v1064
        %1080 = vmatprep.subr.mxu0 %v1067
        %1081 = vmatpush1.msra.mxu0 %v1066
        %1082 = vmatprep.subr.mxu0 0.0
        %1083 = vmatpush1.msra.mxu0 0.0
        %1084 = vmatprep.subr.mxu0 0.0
        %1085 = vmatpush1.msra.mxu0 0.0
        %1086 = vmatprep.subr.mxu0 0.0
        %1087 = vmatpush1.msra.mxu0 0.0
        %1088 = vmatprep.subr.mxu0 0.0
        %1089 = vmatpush1.msra.mxu0 0.0
        %1090 = vmatprep.subr.mxu0 0.0
        %1091 = vmatpush1.msra.mxu0 0.0
        %1092 = vmatprep.subr.mxu0 0.0
        %1093 = vmatpush1.msra.mxu0 0.0
        %1094 = vmatprep.subr.mxu0 0.0
        %1095 = vmatpush1.msra.mxu0 0.0
        %1096 = vmatprep.subr.mxu0 0.0
        %1097 = vmatpush1.msra.mxu0 0.0
        %1098 = vmatprep.subr.mxu0 0.0
        %1099 = vmatpush1.msra.mxu0 0.0
        %1100 = vmatprep.subr.mxu0 0.0
        %1101 = vmatpush1.msra.mxu0 0.0
        %1102 = vmatprep.subr.mxu0 0.0
        %1103 = vmatpush1.msra.mxu0 0.0
        %1104 = vmatprep.subr.mxu0 0.0
        %1105 = vmatpush1.msra.mxu0 0.0
        %1106 = vmatprep.subr.mxu0 0.0
        %1107 = vmatpush1.msra.mxu0 0.0
        %1108 = vmatprep.subr.mxu0 0.0
        %1109 = vmatpush1.msra.mxu0 0.0
        %1110 = vmatprep.subr.mxu0 0.0
        %1111 = vmatpush1.msra.mxu0 0.0
        %1112 = vmatprep.subr.mxu0 0.0
        %1113 = vmatpush1.msra.mxu0 0.0
        %1114 = vmatprep.subr.mxu0 0.0
        %1115 = vmatpush1.msra.mxu0 0.0
        %1116 = vmatprep.subr.mxu0 0.0
        %1117 = vmatpush1.msra.mxu0 0.0
        %1118 = vmatprep.subr.mxu0 0.0
        %1119 = vmatpush1.msra.mxu0 0.0
        %1120 = vmatprep.subr.mxu0 0.0
        %1121 = vmatpush1.msra.mxu0 0.0
        %1122 = vmatprep.subr.mxu0 0.0
        %1123 = vmatpush1.msra.mxu0 0.0
        %1124 = vmatprep.subr.mxu0 0.0
        %1125 = vmatpush1.msra.mxu0 0.0
        %1126 = vmatprep.subr.mxu0 0.0
        %1127 = vmatpush1.msra.mxu0 0.0
        %1128 = vmatprep.subr.mxu0 0.0
        %1129 = vmatpush1.msra.mxu0 0.0
        %1130 = vmatprep.subr.mxu0 0.0
        %1131 = vmatpush1.msra.mxu0 0.0
        %1132 = vmatprep.subr.mxu0 0.0
        %1133 = vmatpush1.msra.mxu0 0.0
        %1134 = vmatprep.subr.mxu0 0.0
        %1135 = vmatpush1.msra.mxu0 0.0
        %1136 = vmatprep.subr.mxu0 0.0
        %1137 = vmatpush1.msra.mxu0 0.0
        %1138 = vmatprep.subr.mxu0 0.0
        %1139 = vmatpush1.msra.mxu0 0.0
        %1140 = vmatprep.subr.mxu0 0.0
        %1141 = vmatpush1.msra.mxu0 0.0
        %1142 = vmatprep.mubr.f32.mxu0 0.0
        %1143 = vmatmul.mubr.f32.gmra.mrb[0].mxu0 %v1076
        %v1144 = vpop.f32.mrb[0].mxu0
        %v1145 = vadd.f32 %v1073, %v1144
        %v1146 = vpop.f32.mrb[0].mxu0
        %v1147 = vadd.f32 %v1073, %v1146
        %1148 = vdwg.mxu0
        %v1149 = vmax.f32 %v1145, 0.0
        %v1150 = vmax.f32 %v1147, 0.0
        %v1151 = vld [vmem:[%s9] sm:$0xff]
        %s1152 = sld [smem:[#allocation2]]
        %1154 = vset.pattern.permute.xlu0 0
        %1155 = vperm.xlu0 %1154, %v1151
        %v1156 = vpop.permute.xlu0 %1155
        %v1158 = vmul.f32 %v1149, %v1156
        %v1159 = vmul.f32 %v1150, %v1156
        %v1160 = vrot.slane %v1158, 4
        %v1161 = vadd.f32 %v1158, %v1160
        %v1162 = vrot.slane %v1161, 2
        %v1163 = vadd.f32 %v1161, %v1162
        %v1164 = vrot.slane %v1163, 1
        %v1165 = vadd.f32 %v1163, %v1164
        %v1166 = vrot.slane %v1159, 4
        %v1167 = vadd.f32 %v1159, %v1166
        %v1168 = vrot.slane %v1167, 2
        %v1169 = vadd.f32 %v1167, %v1168
        %v1170 = vrot.slane %v1169, 1
        %v1171 = vadd.f32 %v1169, %v1170
        %v1172 = vstv %s1152
        %v1173 = vadd.f32 %v1165, %v1172
        %v1174 = vadd.f32 %v1171, %v1172
        %v1177 = vcombine.low %v1173, %v1174
        %v1179 = vunpack.c.l.s4 1966171168
        %v1180 = vunpack.c.0.s8 %v1179
        %v1181 = vlaneseq
        %v1182 = vshrl.u32 %v1181, 7
        %v1183 = vsub.s32 %v1180, %v1182
        %v1184 = vrot.slane %v1177, %v1183
        %v1186 = vunpack.c.l.s4 1966171168
        %v1187 = vunpack.c.0.s8 %v1186
        %v1188 = vlaneseq
        %v1189 = vshrl.u32 %v1188, 7
        %v1190 = vsub.s32 %v1187, %v1189
        %v1191 = vrot.slane %v1184, %v1190
        %v1193 = vlaneseq
        %vm1194 = vcmp.ge.s32.totalorder %v1193, 0
        %vm1195 = vcmp.lt.s32.totalorder %v1193, 256
        %vm1196 = vmand %vm1194, %vm1195
        %1197 = vst.msk [vmem:[%s470] sm:$0x3] %vm1196, %v1191
        %s1198 = sand.u32 %s282, 1
        %s1199 = scalar_lea.sflag [#allocation5], %s1198
        %s1200 = sand.u32 %s282, 1
        %s1201 = smul.addr %s1200, 2
        %s1202 = scalar_lea.vmem [#allocation11], %s1201
        // Predicated region
        $region81: #{tpu_custom_call.1} parent=63 // pred_check
          %p1203 = pneg %p292
        $region82: #{tpu_custom_call.1} parent=63 // pred_check_branch
          %1205 = sbr.rel (%p1203) target = $region84
        $region83: #{tpu_custom_call.1} parent=63 // pred_region
          %s1206 = smul.u32 2, %s33
          %s1208 = ssub.s32 32, 32
          %1209 = vsyncadd %s1199, %s1208
          %s1210 = smul.addr %s1206, 16
          %s1211 = scalar_lea.hbm %s11, %s1210
          %s1213 = sshll.u32 %s1202, 4
          %s1214 = int_to_ptr.vmem [resolvable:$true] %s1213
          %1216 = dma.vmem_to_hbm [thread:$0]  %s1214, 32, %s1211, %s1199
        $region84: #{tpu_custom_call.1} parent=63 // pred_fallthru
          _
      $region64: #{tpu_custom_call.1} parent=5 // pred_fallthru
        _
      %p1217 = scmp.le.s32.totalorder 2, %s28
      // Predicated region
      $region85: #{tpu_custom_call.1} parent=5 // pred_check
        %p1218 = pneg %p1217
      $region86: #{tpu_custom_call.1} parent=5 // pred_check_branch
        %1220 = sbr.rel (%p1218) target = $region88
      $region87: #{tpu_custom_call.1} parent=5 // pred_region
        %s1221 = ssub.s32 %s28, 2
        // Predicated region
        $region89: #{tpu_custom_call.1} parent=87 // pred_check
          %p1222 = pneg %p298
        $region90: #{tpu_custom_call.1} parent=87 // pred_check_branch
          %1224 = sbr.rel (%p1222) target = $region92
        $region91: #{tpu_custom_call.1} parent=87 // pred_region
          %s1225 = sand.u32 %s283, 1
          %s1226 = scalar_lea.sflag [#allocation5], %s1225
          %s1227 = sand.u32 %s283, 1
          %s1228 = smul.addr %s1227, 2
          %s1229 = scalar_lea.vmem [#allocation11], %s1228
          %1230 = dma.done %s1226, 32
        $region92: #{tpu_custom_call.1} parent=87 // pred_fallthru
          _
      $region88: #{tpu_custom_call.1} parent=5 // pred_fallthru
        _
    $region6: #{tpu_custom_call.1} parent=1 // loop_footer
      %s32 = sadd.s32 1, %s28
    $region7: #{tpu_custom_call.1} parent=1 // loop_footer_branch
      %27 = sbr.rel target = $region3
    $region8: #{tpu_custom_call.1} parent=1 // loop_exit
      _
    %1231 = vsyncpa [#allocation4], 1
    %s1232 = scalar_lea.sflag [#allocation4], 1
    %1233 = vsyncpa %s1232, 1
    %1234 = vsyncpa [#allocation7], 1
    %s1235 = scalar_lea.sflag [#allocation7], 1
    %1236 = vsyncpa %s1235, 1
    %1237 = vsyncpa [#allocation10], 1
    %1238 = vsyncpa [#allocation5], 1
    %s1239 = scalar_lea.sflag [#allocation5], 1
    %1240 = vsyncpa %s1239, 1

</llo_original>
